<compile_context>
chip_gen: v6e
topology: v6e:2x2x1
jax: 0.10.0
libtpu: 0.0.40
codegen_flags: <defaults>
</compile_context>

<pallas_src>
import functools

import jax
import jax.numpy as jnp
from jax.experimental import pallas as pl
from jax.experimental.pallas import tpu as pltpu


# Slab row layout (all 8-row aligned, 128 lanes wide).
_R_W1 = 0      # conv1 weight, block-diag over positions   rows [  0,128)
_R_W2 = 128    # conv2 weight, block-diag                  rows [128,256)
_R_W3 = 256    # conv3 weight, block-diag                  rows [256,384)
_R_F1 = 384    # fc1 weight, Flatten permutation folded in rows [384,512)
_R_F2 = 512    # fc2 weight, lane-padded to 128 outputs    rows [512,640)
_R_B = 640     # bias block: row i = bias of layer i+1     rows [640,648)
_SLAB_ROWS = 648
_LANES = 128


# ----------------------------------------------------------------------------
# Kernel: 5 chained (B,128)@(128,128) matmuls + biases + ReLUs. No grid.
# ----------------------------------------------------------------------------
def _cnn_kernel(xs_ref, w_ref, o_ref):
    bias = w_ref[_R_B:_R_B + 8, :]                    # (8, 128) bias rows
    a = xs_ref[...]                                   # (Bp, 128) padded survivors
    a = jnp.maximum(
        jnp.dot(a, w_ref[_R_W1:_R_W1 + 128, :],
                preferred_element_type=jnp.float32) + bias[0:1, :], 0.0)   # conv1
    a = jnp.maximum(
        jnp.dot(a, w_ref[_R_W2:_R_W2 + 128, :],
                preferred_element_type=jnp.float32) + bias[1:2, :], 0.0)   # conv2
    a = jnp.maximum(
        jnp.dot(a, w_ref[_R_W3:_R_W3 + 128, :],
                preferred_element_type=jnp.float32) + bias[2:3, :], 0.0)   # conv3
    a = jnp.maximum(
        jnp.dot(a, w_ref[_R_F1:_R_F1 + 128, :],
                preferred_element_type=jnp.float32) + bias[3:4, :], 0.0)   # fc1
    o_ref[...] = (
        jnp.dot(a, w_ref[_R_F2:_R_F2 + 128, :],
                preferred_element_type=jnp.float32) + bias[4:5, :])        # fc2


# ----------------------------------------------------------------------------
# One-time parameter packing (hoisted out of the forward path entirely).
# ----------------------------------------------------------------------------
def prepare_params(params, height, width):
    """Pack all weights/biases into a single (648, 128) f32 slab."""
    h1 = (height - 1) // 4 + 1
    w1 = (width - 1) // 4 + 1
    h3 = (h1 - 1) // 2 + 1
    w3 = (w1 - 1) // 2 + 1
    P = h3 * w3
    assert 64 * P == 128, "Flatten size must equal Linear(128, .) input"

    f32 = jnp.float32
    w1_t = params["w1_t"].astype(f32)                 # (C, 32); forward uses C == 1
    C = w1_t.shape[0]
    assert C == 1, "forward() unsqueezes a single channel"
    O = params["wf2_t"].shape[1]
    assert O <= _LANES

    W1b = jnp.zeros((128, 128), f32)
    W2b = jnp.zeros((128, 128), f32)
    W3b = jnp.zeros((128, 128), f32)
    for p in range(P):
        W1b = W1b.at[p * C:(p + 1) * C, p * 32:(p + 1) * 32].set(w1_t)
        W2b = W2b.at[p * 32:(p + 1) * 32, p * 64:(p + 1) * 64].set(
            params["w2_t"].astype(f32))
        W3b = W3b.at[p * 64:(p + 1) * 64, p * 64:(p + 1) * 64].set(
            params["w3_t"].astype(f32))

    # PyTorch Flatten is channel-major (k = c*P + p); activations here are
    # position-major (p*64 + c): fold the permutation into the fc1 weight.
    wf1p = (params["wf1_t"].astype(f32)
            .reshape(64, P, 64).transpose(1, 0, 2).reshape(P * 64, 64))
    F1b = jnp.zeros((128, 128), f32).at[:, :64].set(wf1p)
    F2b = jnp.zeros((128, 128), f32).at[:64, :O].set(params["wf2_t"].astype(f32))

    bias = jnp.zeros((8, 128), f32)
    for p in range(P):
        bias = bias.at[0, p * 32:(p + 1) * 32].set(params["b1"][0].astype(f32))
        bias = bias.at[1, p * 64:(p + 1) * 64].set(params["b2"][0].astype(f32))
        bias = bias.at[2, p * 64:(p + 1) * 64].set(params["b3"][0].astype(f32))
    bias = bias.at[3, :64].set(params["bf1"][0].astype(f32))
    bias = bias.at[4, :O].set(params["bf2"][0].astype(f32))

    slab = jnp.concatenate([W1b, W2b, W3b, F1b, F2b, bias], axis=0)
    assert slab.shape == (_SLAB_ROWS, _LANES)
    return slab


# ----------------------------------------------------------------------------
# Forward: survivor gather + padding + single gridless pallas_call, one jit.
# ----------------------------------------------------------------------------
@functools.partial(jax.jit, static_argnames=("output_dim",))
def cnn_forward(x, slab, *, output_dim):
    """x: (B, H, W) or (H, W). Mirrors Cnn.forward (channel dim is unsqueezed)."""
    x = jnp.asarray(x, jnp.float32)
    if x.ndim == 2:                                   # input.unsqueeze(0) path
        x = x[None]
    B, H, W = x.shape
    h1 = (H - 1) // 4 + 1
    w1 = (W - 1) // 4 + 1
    h3 = (h1 - 1) // 2 + 1
    w3 = (w1 - 1) // 2 + 1
    P = h3 * w3
    assert 64 * P == 128, "Flatten size must equal Linear(128, .) input"

    # Only pixels at stride 8 of the original input survive the strided 1x1
    # convs. Gather, lane-pad to 128 and sublane-pad B to a multiple of 8; all
    # of this fuses under this jit, right in front of the kernel.
    xs = x[:, ::8, ::8].reshape(B, P)
    Bp = -(-B // 8) * 8
    xs = jnp.zeros((Bp, _LANES), jnp.float32).at[:B, :P].set(xs)

    out = pl.pallas_call(
        _cnn_kernel,
        out_shape=jax.ShapeDtypeStruct((Bp, _LANES), jnp.float32),
        in_specs=[pl.BlockSpec(memory_space=pltpu.MemorySpace.VMEM),
                  pl.BlockSpec(memory_space=pltpu.MemorySpace.VMEM)],
        out_specs=pl.BlockSpec(memory_space=pltpu.MemorySpace.VMEM),
    )(xs, slab)
    return out[:B, :output_dim]


# ----------------------------------------------------------------------------
# Deterministic parameter init matching the PyTorch module's shapes.
# Weights are stored pre-transposed to right-multiply form (in, out).
# ----------------------------------------------------------------------------
def init_params(key, channels, output_dim):
    def u(k, shape, fan_in):
        bound = 1.0 / jnp.sqrt(jnp.float32(fan_in))
        return jax.random.uniform(k, shape, jnp.float32, -bound, bound)

    ks = jax.random.split(key, 10)
    return {
        "w1_t": u(ks[0], (channels, 32), channels),    # Conv2d(channels, 32, k=1)
        "b1":   u(ks[1], (1, 32), channels),
        "w2_t": u(ks[2], (32, 64), 32),                # Conv2d(32, 64, k=1)
        "b2":   u(ks[3], (1, 64), 32),
        "w3_t": u(ks[4], (64, 64), 64),                # Conv2d(64, 64, k=1)
        "b3":   u(ks[5], (1, 64), 64),
        "wf1_t": u(ks[6], (128, 64), 128),             # Linear(128, 64)
        "bf1":   u(ks[7], (1, 64), 128),
        "wf2_t": u(ks[8], (64, output_dim), 64),       # Linear(64, output_dim)
        "bf2":   u(ks[9], (1, output_dim), 64),
    }


# ----------------------------------------------------------------------------
# Pure-JAX reference (literal conv/flatten/linear path) for correctness checking.
# ----------------------------------------------------------------------------
def cnn_reference(x, params):
    x = jnp.asarray(x, jnp.float32)
    if x.ndim == 2:
        x = x[None]
    a = x[:, None]                                     # unsqueeze(1) -> (B, 1, H, W)

    def conv1x1(a, w_t, b, stride):
        a = a[:, :, ::stride, ::stride]
        return jnp.einsum("bchw,co->bohw", a, w_t) + b[0][None, :, None, None]

    a = jax.nn.relu(conv1x1(a, params["w1_t"], params["b1"], 4))
    a = jax.nn.relu(conv1x1(a, params["w2_t"], params["b2"], 2))
    a = jax.nn.relu(conv1x1(a, params["w3_t"], params["b3"], 1))
    flat = a.reshape(a.shape[0], -1)                   # nn.Flatten (channel-major)
    h = jax.nn.relu(flat @ params["wf1_t"] + params["bf1"])
    return h @ params["wf2_t"] + params["bf2"]


if __name__ == "__main__":
    # Shapes consistent with the module: channels=1 (forward unsqueezes it),
    # spatial (16, 8) makes the flatten 64*2*1 = 128 = Linear(128, 64) input.
    # B=8 keeps the batch sublane-aligned (f32 sublane = 8).
    B, H, W = 8, 16, 8
    channels, output_dim = 1, 10

    key = jax.random.PRNGKey(0)
    key, xk = jax.random.split(key)
    x = jax.random.normal(xk, (B, H, W), dtype=jnp.float32)

    params = init_params(key, channels, output_dim)
    slab = prepare_params(params, H, W)                # one-time weight packing

    out = jax.block_until_ready(cnn_forward(x, slab, output_dim=output_dim))
    ref = cnn_reference(x, params)

    assert out.shape == (B, output_dim)
    assert jnp.allclose(out, ref, atol=1e-4, rtol=1e-4)
    print("KERNEL_OK")
</pallas_src>

<mosaic_0001>
module attributes {stable_mosaic.version = 11 : i64} {
  func.func @_cnn_kernel(%arg0: memref<8x128xf32, #tpu.memory_space<vmem>>, %arg1: memref<648x128xf32, #tpu.memory_space<vmem>>, %arg2: memref<8x128xf32, #tpu.memory_space<vmem>>) attributes {dimension_semantics = [], scalar_prefetch = 0 : i64, scratch_operands = 0 : i64, tpu.core_type = #tpu.core_type<tc>} {
    %c640 = arith.constant 640 : index
    %c0 = arith.constant 0 : index
    %0 = vector.load %arg1[%c640, %c0] : memref<648x128xf32, #tpu.memory_space<vmem>>, vector<8x128xf32>
    %c0_0 = arith.constant 0 : index
    %c0_1 = arith.constant 0 : index
    %1 = vector.load %arg0[%c0_0, %c0_1] : memref<8x128xf32, #tpu.memory_space<vmem>>, vector<8x128xf32>
    %c0_2 = arith.constant 0 : index
    %c0_3 = arith.constant 0 : index
    %2 = vector.load %arg1[%c0_2, %c0_3] : memref<648x128xf32, #tpu.memory_space<vmem>>, vector<128x128xf32>
    %cst = arith.constant dense<0.000000e+00> : vector<8x128xf32>
    %3 = tpu.matmul %1, %2, %cst {dimension_numbers = #tpu.dot_dimension_numbers<[1], [0], [0], [1], [0, 0, 1, 1], [], []>} : vector<8x128xf32>, vector<128x128xf32>, vector<8x128xf32> -> vector<8x128xf32>
    %4 = vector.extract_strided_slice %0 {offsets = [0, 0], sizes = [1, 128], strides = [1, 1]} : vector<8x128xf32> to vector<1x128xf32>
    %5 = vector.broadcast %4 : vector<1x128xf32> to vector<8x128xf32>
    %6 = arith.addf %3, %5 : vector<8x128xf32>
    %cst_4 = arith.constant 0.000000e+00 : f32
    %7 = vector.broadcast %cst_4 : f32 to vector<8x128xf32>
    %8 = arith.maximumf %6, %7 : vector<8x128xf32>
    %c128 = arith.constant 128 : index
    %c0_5 = arith.constant 0 : index
    %9 = vector.load %arg1[%c128, %c0_5] : memref<648x128xf32, #tpu.memory_space<vmem>>, vector<128x128xf32>
    %cst_6 = arith.constant dense<0.000000e+00> : vector<8x128xf32>
    %10 = tpu.matmul %8, %9, %cst_6 {dimension_numbers = #tpu.dot_dimension_numbers<[1], [0], [0], [1], [0, 0, 1, 1], [], []>} : vector<8x128xf32>, vector<128x128xf32>, vector<8x128xf32> -> vector<8x128xf32>
    %11 = vector.extract_strided_slice %0 {offsets = [1, 0], sizes = [1, 128], strides = [1, 1]} : vector<8x128xf32> to vector<1x128xf32>
    %12 = vector.broadcast %11 : vector<1x128xf32> to vector<8x128xf32>
    %13 = arith.addf %10, %12 : vector<8x128xf32>
    %cst_7 = arith.constant 0.000000e+00 : f32
    %14 = vector.broadcast %cst_7 : f32 to vector<8x128xf32>
    %15 = arith.maximumf %13, %14 : vector<8x128xf32>
    %c256 = arith.constant 256 : index
    %c0_8 = arith.constant 0 : index
    %16 = vector.load %arg1[%c256, %c0_8] : memref<648x128xf32, #tpu.memory_space<vmem>>, vector<128x128xf32>
    %cst_9 = arith.constant dense<0.000000e+00> : vector<8x128xf32>
    %17 = tpu.matmul %15, %16, %cst_9 {dimension_numbers = #tpu.dot_dimension_numbers<[1], [0], [0], [1], [0, 0, 1, 1], [], []>} : vector<8x128xf32>, vector<128x128xf32>, vector<8x128xf32> -> vector<8x128xf32>
    %18 = vector.extract_strided_slice %0 {offsets = [2, 0], sizes = [1, 128], strides = [1, 1]} : vector<8x128xf32> to vector<1x128xf32>
    %19 = vector.broadcast %18 : vector<1x128xf32> to vector<8x128xf32>
    %20 = arith.addf %17, %19 : vector<8x128xf32>
    %cst_10 = arith.constant 0.000000e+00 : f32
    %21 = vector.broadcast %cst_10 : f32 to vector<8x128xf32>
    %22 = arith.maximumf %20, %21 : vector<8x128xf32>
    %c384 = arith.constant 384 : index
    %c0_11 = arith.constant 0 : index
    %23 = vector.load %arg1[%c384, %c0_11] : memref<648x128xf32, #tpu.memory_space<vmem>>, vector<128x128xf32>
    %cst_12 = arith.constant dense<0.000000e+00> : vector<8x128xf32>
    %24 = tpu.matmul %22, %23, %cst_12 {dimension_numbers = #tpu.dot_dimension_numbers<[1], [0], [0], [1], [0, 0, 1, 1], [], []>} : vector<8x128xf32>, vector<128x128xf32>, vector<8x128xf32> -> vector<8x128xf32>
    %25 = vector.extract_strided_slice %0 {offsets = [3, 0], sizes = [1, 128], strides = [1, 1]} : vector<8x128xf32> to vector<1x128xf32>
    %26 = vector.broadcast %25 : vector<1x128xf32> to vector<8x128xf32>
    %27 = arith.addf %24, %26 : vector<8x128xf32>
    %cst_13 = arith.constant 0.000000e+00 : f32
    %28 = vector.broadcast %cst_13 : f32 to vector<8x128xf32>
    %29 = arith.maximumf %27, %28 : vector<8x128xf32>
    %c512 = arith.constant 512 : index
    %c0_14 = arith.constant 0 : index
    %30 = vector.load %arg1[%c512, %c0_14] : memref<648x128xf32, #tpu.memory_space<vmem>>, vector<128x128xf32>
    %cst_15 = arith.constant dense<0.000000e+00> : vector<8x128xf32>
    %31 = tpu.matmul %29, %30, %cst_15 {dimension_numbers = #tpu.dot_dimension_numbers<[1], [0], [0], [1], [0, 0, 1, 1], [], []>} : vector<8x128xf32>, vector<128x128xf32>, vector<8x128xf32> -> vector<8x128xf32>
    %32 = vector.extract_strided_slice %0 {offsets = [4, 0], sizes = [1, 128], strides = [1, 1]} : vector<8x128xf32> to vector<1x128xf32>
    %33 = vector.broadcast %32 : vector<1x128xf32> to vector<8x128xf32>
    %34 = arith.addf %31, %33 : vector<8x128xf32>
    %c0_16 = arith.constant 0 : index
    %c0_17 = arith.constant 0 : index
    %35 = vector.load %arg2[%c0_16, %c0_17] : memref<8x128xf32, #tpu.memory_space<vmem>>, vector<8x128xf32>
    tpu.vector_store %arg2[%c0_16, %c0_17], %34 {strides = array<i32>} : memref<8x128xf32, #tpu.memory_space<vmem>>, vector<8x128xf32>,
    return
  }
}

</mosaic_0001>

<llo_original>
// kernel: cnn_forward.1
$region0: #{cnn_forward.1}
  #allocation0 [shape = 'u32[]', space=smem, size = 0x4, offset = 0x4, fixed_abs, tag = 'smem constant byte address 0x4 - core index']
  #allocation1 [shape = 'u32[144,128]{1,0:T(1,128)}', space=vmem, size = 0x12000, scoped, tag = 'internal scratch']
  %s0 = inlined_call_operand.vmem [shape: f32[8,128], index: 0, kind: input, shape index: {}]
  %s1 = inlined_call_operand.hbm [shape: f32[648,128], index: 1, kind: input, shape index: {}]
  %s2 = inlined_call_operand.hbm [shape: f32[8,128], index: 2, kind: output, shape index: {}]
  %s3 = sld [smem:[#allocation0]]
  $region22: #{cnn_forward.1} parent=0
    _
  %s5 = ssub.s32 1, %s3
  %s6 = scalar_select 0, %s5, %s3
  $region1: #{cnn_forward.1} parent=0
    #allocation2 [shape = 'u8[331776]{0}', space=vmem, size = 0x51000, scoped, tag = 'input window, operand 1, single buffered']
    #allocation3 [shape = 's32[1]{0}', space=sflag, size = 0x4, scoped, tag = 'scoped memory for cnn_forward.1']
    #allocation4 [shape = 's32[1]{0}', space=sflag, size = 0x4, scoped, tag = 'scoped memory for cnn_forward.1']
    #allocation5 [shape = 'u8[4096]{0}', space=vmem, size = 0x1000, scoped, tag = 'output window, operand 0, single buffered']
    %7 = vsyncpa [#allocation3], 0
    %8 = vsyncpa [#allocation4], 0
    // Predicated region
    $region2: #{cnn_forward.1} parent=1 // pred_check
      _
    $region3: #{cnn_forward.1} parent=1 // pred_check_branch
      %10 = sbr.rel (0) target = $region5
    $region4: #{cnn_forward.1} parent=1 // pred_region
      _
    $region5: #{cnn_forward.1} parent=1 // pred_fallthru
      _
    // Predicated region
    $region6: #{cnn_forward.1} parent=1 // pred_check
      _
    $region7: #{cnn_forward.1} parent=1 // pred_check_branch
      %12 = sbr.rel (0) target = $region9
    $region8: #{cnn_forward.1} parent=1 // pred_region
      %s14 = ssub.s32 10368, 10368
      %15 = vsyncadd [#allocation3], %s14
      %s16 = sshll.u32 [#allocation2], 4
      %s17 = int_to_ptr.vmem [resolvable:$true] %s16
      %22 = dma.hbm_to_vmem [thread:$0]  %s1, 10368, %s17, [#allocation3], 128, 128, 8
    $region9: #{cnn_forward.1} parent=1 // pred_fallthru
      _
    // Predicated region
    $region10: #{cnn_forward.1} parent=1 // pred_check
      _
    $region11: #{cnn_forward.1} parent=1 // pred_check_branch
      %24 = sbr.rel (0) target = $region13
    $region12: #{cnn_forward.1} parent=1 // pred_region
      %25 = dma.done [#allocation3], 10368
    $region13: #{cnn_forward.1} parent=1 // pred_fallthru
      _
    %v26 = vld [vmem:[#allocation2 + $0x280] sm:$0xff]
    %v27 = vld [vmem:[%s0] sm:$0xff]
    %v28 = vld [vmem:[#allocation2] sm:$0xff]
    %v29 = vld [vmem:[#allocation2 + $0x8] sm:$0xff]
    %v30 = vld [vmem:[#allocation2 + $0x10] sm:$0xff]
    %v31 = vld [vmem:[#allocation2 + $0x18] sm:$0xff]
    %v32 = vld [vmem:[#allocation2 + $0x20] sm:$0xff]
    %v33 = vld [vmem:[#allocation2 + $0x28] sm:$0xff]
    %v34 = vld [vmem:[#allocation2 + $0x30] sm:$0xff]
    %v35 = vld [vmem:[#allocation2 + $0x38] sm:$0xff]
    %v36 = vld [vmem:[#allocation2 + $0x40] sm:$0xff]
    %v37 = vld [vmem:[#allocation2 + $0x48] sm:$0xff]
    %v38 = vld [vmem:[#allocation2 + $0x50] sm:$0xff]
    %v39 = vld [vmem:[#allocation2 + $0x58] sm:$0xff]
    %v40 = vld [vmem:[#allocation2 + $0x60] sm:$0xff]
    %v41 = vld [vmem:[#allocation2 + $0x68] sm:$0xff]
    %v42 = vld [vmem:[#allocation2 + $0x70] sm:$0xff]
    %v43 = vld [vmem:[#allocation2 + $0x78] sm:$0xff]
    %v44 = vlaneseq
    %v45 = vshrl.u32 %v44, 7
    %v46 = vsub.s32 0, %v45
    %v47 = vrot.slane %v26, %v46
    %48 = vmatprep.subr.mxu0 0.0
    %49 = vmatpush1.msra.mxu0 %v43
    %50 = vmatprep.subr.mxu0 0.0
    %51 = vmatpush1.msra.mxu0 %v42
    %52 = vmatprep.subr.mxu0 0.0
    %53 = vmatpush1.msra.mxu0 %v41
    %54 = vmatprep.subr.mxu0 0.0
    %55 = vmatpush1.msra.mxu0 %v40
    %56 = vmatprep.subr.mxu0 0.0
    %57 = vmatpush1.msra.mxu0 %v39
    %58 = vmatprep.subr.mxu0 0.0
    %59 = vmatpush1.msra.mxu0 %v38
    %60 = vmatprep.subr.mxu0 0.0
    %61 = vmatpush1.msra.mxu0 %v37
    %62 = vmatprep.subr.mxu0 0.0
    %63 = vmatpush1.msra.mxu0 %v36
    %64 = vmatprep.subr.mxu0 0.0
    %65 = vmatpush1.msra.mxu0 %v35
    %66 = vmatprep.subr.mxu0 0.0
    %67 = vmatpush1.msra.mxu0 %v34
    %68 = vmatprep.subr.mxu0 0.0
    %69 = vmatpush1.msra.mxu0 %v33
    %70 = vmatprep.subr.mxu0 0.0
    %71 = vmatpush1.msra.mxu0 %v32
    %72 = vmatprep.subr.mxu0 0.0
    %73 = vmatpush1.msra.mxu0 %v31
    %74 = vmatprep.subr.mxu0 0.0
    %75 = vmatpush1.msra.mxu0 %v30
    %76 = vmatprep.subr.mxu0 0.0
    %77 = vmatpush1.msra.mxu0 %v29
    %78 = vmatprep.subr.mxu0 0.0
    %79 = vmatpush1.msra.mxu0 %v28
    %80 = vmatprep.subr.mxu0 0.0
    %81 = vmatpush2.msra.mxu0 0.0
    %82 = vmatprep.subr.mxu0 0.0
    %83 = vmatpush2.msra.mxu0 0.0
    %84 = vmatprep.subr.mxu0 0.0
    %85 = vmatpush2.msra.mxu0 0.0
    %86 = vmatprep.subr.mxu0 0.0
    %87 = vmatpush2.msra.mxu0 0.0
    %88 = vmatprep.subr.mxu0 0.0
    %89 = vmatpush2.msra.mxu0 0.0
    %90 = vmatprep.subr.mxu0 0.0
    %91 = vmatpush2.msra.mxu0 0.0
    %92 = vmatprep.subr.mxu0 0.0
    %93 = vmatpush2.msra.mxu0 0.0
    %94 = vmatprep.subr.mxu0 0.0
    %95 = vmatpush2.msra.mxu0 0.0
    %96 = vmatprep.subr.mxu0 0.0
    %97 = vmatpush2.msra.mxu0 0.0
    %98 = vmatprep.subr.mxu0 0.0
    %99 = vmatpush2.msra.mxu0 0.0
    %100 = vmatprep.subr.mxu0 0.0
    %101 = vmatpush2.msra.mxu0 0.0
    %102 = vmatprep.subr.mxu0 0.0
    %103 = vmatpush2.msra.mxu0 0.0
    %104 = vmatprep.subr.mxu0 0.0
    %105 = vmatpush2.msra.mxu0 0.0
    %106 = vmatprep.subr.mxu0 0.0
    %107 = vmatpush2.msra.mxu0 0.0
    %108 = vmatprep.subr.mxu0 0.0
    %109 = vmatpush2.msra.mxu0 0.0
    %110 = vmatprep.subr.mxu0 0.0
    %111 = vmatpush2.msra.mxu0 0.0
    %112 = vmatprep.mubr.f32.mxu0 0.0
    %113 = vmatmul.mubr.f32.gmra.mxu0 %v27
    %v114 = vpop.f32.mrf.mxu0
    %v115 = vadd.f32 %v47, %v114
    %v116 = vpop.f32.mrf.mxu0
    %117 = vdwg.mxu0
    %v118 = vmax.f32 %v115, 0.0
    %v119 = vld [vmem:[#allocation2 + $0x80] sm:$0xff]
    %v120 = vld [vmem:[#allocation2 + $0x88] sm:$0xff]
    %v121 = vld [vmem:[#allocation2 + $0x90] sm:$0xff]
    %v122 = vld [vmem:[#allocation2 + $0x98] sm:$0xff]
    %v123 = vld [vmem:[#allocation2 + $0xa0] sm:$0xff]
    %v124 = vld [vmem:[#allocation2 + $0xa8] sm:$0xff]
    %v125 = vld [vmem:[#allocation2 + $0xb0] sm:$0xff]
    %v126 = vld [vmem:[#allocation2 + $0xb8] sm:$0xff]
    %v127 = vld [vmem:[#allocation2 + $0xc0] sm:$0xff]
    %v128 = vld [vmem:[#allocation2 + $0xc8] sm:$0xff]
    %v129 = vld [vmem:[#allocation2 + $0xd0] sm:$0xff]
    %v130 = vld [vmem:[#allocation2 + $0xd8] sm:$0xff]
    %v131 = vld [vmem:[#allocation2 + $0xe0] sm:$0xff]
    %v132 = vld [vmem:[#allocation2 + $0xe8] sm:$0xff]
    %v133 = vld [vmem:[#allocation2 + $0xf0] sm:$0xff]
    %v134 = vld [vmem:[#allocation2 + $0xf8] sm:$0xff]
    %v135 = vlaneseq
    %v136 = vshrl.u32 %v135, 7
    %v137 = vsub.s32 1, %v136
    %v138 = vrot.slane %v26, %v137
    %139 = vmatprep.subr.mxu0 0.0
    %140 = vmatpush1.msra.mxu0 %v134
    %141 = vmatprep.subr.mxu0 0.0
    %142 = vmatpush1.msra.mxu0 %v133
    %143 = vmatprep.subr.mxu0 0.0
    %144 = vmatpush1.msra.mxu0 %v132
    %145 = vmatprep.subr.mxu0 0.0
    %146 = vmatpush1.msra.mxu0 %v131
    %147 = vmatprep.subr.mxu0 0.0
    %148 = vmatpush1.msra.mxu0 %v130
    %149 = vmatprep.subr.mxu0 0.0
    %150 = vmatpush1.msra.mxu0 %v129
    %151 = vmatprep.subr.mxu0 0.0
    %152 = vmatpush1.msra.mxu0 %v128
    %153 = vmatprep.subr.mxu0 0.0
    %154 = vmatpush1.msra.mxu0 %v127
    %155 = vmatprep.subr.mxu0 0.0
    %156 = vmatpush1.msra.mxu0 %v126
    %157 = vmatprep.subr.mxu0 0.0
    %158 = vmatpush1.msra.mxu0 %v125
    %159 = vmatprep.subr.mxu0 0.0
    %160 = vmatpush1.msra.mxu0 %v124
    %161 = vmatprep.subr.mxu0 0.0
    %162 = vmatpush1.msra.mxu0 %v123
    %163 = vmatprep.subr.mxu0 0.0
    %164 = vmatpush1.msra.mxu0 %v122
    %165 = vmatprep.subr.mxu0 0.0
    %166 = vmatpush1.msra.mxu0 %v121
    %167 = vmatprep.subr.mxu0 0.0
    %168 = vmatpush1.msra.mxu0 %v120
    %169 = vmatprep.subr.mxu0 0.0
    %170 = vmatpush1.msra.mxu0 %v119
    %171 = vmatprep.subr.mxu0 0.0
    %172 = vmatpush2.msra.mxu0 0.0
    %173 = vmatprep.subr.mxu0 0.0
    %174 = vmatpush2.msra.mxu0 0.0
    %175 = vmatprep.subr.mxu0 0.0
    %176 = vmatpush2.msra.mxu0 0.0
    %177 = vmatprep.subr.mxu0 0.0
    %178 = vmatpush2.msra.mxu0 0.0
    %179 = vmatprep.subr.mxu0 0.0
    %180 = vmatpush2.msra.mxu0 0.0
    %181 = vmatprep.subr.mxu0 0.0
    %182 = vmatpush2.msra.mxu0 0.0
    %183 = vmatprep.subr.mxu0 0.0
    %184 = vmatpush2.msra.mxu0 0.0
    %185 = vmatprep.subr.mxu0 0.0
    %186 = vmatpush2.msra.mxu0 0.0
    %187 = vmatprep.subr.mxu0 0.0
    %188 = vmatpush2.msra.mxu0 0.0
    %189 = vmatprep.subr.mxu0 0.0
    %190 = vmatpush2.msra.mxu0 0.0
    %191 = vmatprep.subr.mxu0 0.0
    %192 = vmatpush2.msra.mxu0 0.0
    %193 = vmatprep.subr.mxu0 0.0
    %194 = vmatpush2.msra.mxu0 0.0
    %195 = vmatprep.subr.mxu0 0.0
    %196 = vmatpush2.msra.mxu0 0.0
    %197 = vmatprep.subr.mxu0 0.0
    %198 = vmatpush2.msra.mxu0 0.0
    %199 = vmatprep.subr.mxu0 0.0
    %200 = vmatpush2.msra.mxu0 0.0
    %201 = vmatprep.subr.mxu0 0.0
    %202 = vmatpush2.msra.mxu0 0.0
    %203 = vmatprep.mubr.f32.mxu0 0.0
    %204 = vmatmul.mubr.f32.gmra.mxu0 %v118
    %v205 = vpop.f32.mrf.mxu0
    %v206 = vadd.f32 %v138, %v205
    %v207 = vpop.f32.mrf.mxu0
    %208 = vdwg.mxu0
    %v209 = vmax.f32 %v206, 0.0
    %v210 = vld [vmem:[#allocation2 + $0x100] sm:$0xff]
    %v211 = vld [vmem:[#allocation2 + $0x108] sm:$0xff]
    %v212 = vld [vmem:[#allocation2 + $0x110] sm:$0xff]
    %v213 = vld [vmem:[#allocation2 + $0x118] sm:$0xff]
    %v214 = vld [vmem:[#allocation2 + $0x120] sm:$0xff]
    %v215 = vld [vmem:[#allocation2 + $0x128] sm:$0xff]
    %v216 = vld [vmem:[#allocation2 + $0x130] sm:$0xff]
    %v217 = vld [vmem:[#allocation2 + $0x138] sm:$0xff]
    %v218 = vld [vmem:[#allocation2 + $0x140] sm:$0xff]
    %v219 = vld [vmem:[#allocation2 + $0x148] sm:$0xff]
    %v220 = vld [vmem:[#allocation2 + $0x150] sm:$0xff]
    %v221 = vld [vmem:[#allocation2 + $0x158] sm:$0xff]
    %v222 = vld [vmem:[#allocation2 + $0x160] sm:$0xff]
    %v223 = vld [vmem:[#allocation2 + $0x168] sm:$0xff]
    %v224 = vld [vmem:[#allocation2 + $0x170] sm:$0xff]
    %v225 = vld [vmem:[#allocation2 + $0x178] sm:$0xff]
    %v226 = vlaneseq
    %v227 = vshrl.u32 %v226, 7
    %v228 = vsub.s32 2, %v227
    %v229 = vrot.slane %v26, %v228
    %230 = vmatprep.subr.mxu0 0.0
    %231 = vmatpush1.msra.mxu0 %v225
    %232 = vmatprep.subr.mxu0 0.0
    %233 = vmatpush1.msra.mxu0 %v224
    %234 = vmatprep.subr.mxu0 0.0
    %235 = vmatpush1.msra.mxu0 %v223
    %236 = vmatprep.subr.mxu0 0.0
    %237 = vmatpush1.msra.mxu0 %v222
    %238 = vmatprep.subr.mxu0 0.0
    %239 = vmatpush1.msra.mxu0 %v221
    %240 = vmatprep.subr.mxu0 0.0
    %241 = vmatpush1.msra.mxu0 %v220
    %242 = vmatprep.subr.mxu0 0.0
    %243 = vmatpush1.msra.mxu0 %v219
    %244 = vmatprep.subr.mxu0 0.0
    %245 = vmatpush1.msra.mxu0 %v218
    %246 = vmatprep.subr.mxu0 0.0
    %247 = vmatpush1.msra.mxu0 %v217
    %248 = vmatprep.subr.mxu0 0.0
    %249 = vmatpush1.msra.mxu0 %v216
    %250 = vmatprep.subr.mxu0 0.0
    %251 = vmatpush1.msra.mxu0 %v215
    %252 = vmatprep.subr.mxu0 0.0
    %253 = vmatpush1.msra.mxu0 %v214
    %254 = vmatprep.subr.mxu0 0.0
    %255 = vmatpush1.msra.mxu0 %v213
    %256 = vmatprep.subr.mxu0 0.0
    %257 = vmatpush1.msra.mxu0 %v212
    %258 = vmatprep.subr.mxu0 0.0
    %259 = vmatpush1.msra.mxu0 %v211
    %260 = vmatprep.subr.mxu0 0.0
    %261 = vmatpush1.msra.mxu0 %v210
    %262 = vmatprep.subr.mxu0 0.0
    %263 = vmatpush2.msra.mxu0 0.0
    %264 = vmatprep.subr.mxu0 0.0
    %265 = vmatpush2.msra.mxu0 0.0
    %266 = vmatprep.subr.mxu0 0.0
    %267 = vmatpush2.msra.mxu0 0.0
    %268 = vmatprep.subr.mxu0 0.0
    %269 = vmatpush2.msra.mxu0 0.0
    %270 = vmatprep.subr.mxu0 0.0
    %271 = vmatpush2.msra.mxu0 0.0
    %272 = vmatprep.subr.mxu0 0.0
    %273 = vmatpush2.msra.mxu0 0.0
    %274 = vmatprep.subr.mxu0 0.0
    %275 = vmatpush2.msra.mxu0 0.0
    %276 = vmatprep.subr.mxu0 0.0
    %277 = vmatpush2.msra.mxu0 0.0
    %278 = vmatprep.subr.mxu0 0.0
    %279 = vmatpush2.msra.mxu0 0.0
    %280 = vmatprep.subr.mxu0 0.0
    %281 = vmatpush2.msra.mxu0 0.0
    %282 = vmatprep.subr.mxu0 0.0
    %283 = vmatpush2.msra.mxu0 0.0
    %284 = vmatprep.subr.mxu0 0.0
    %285 = vmatpush2.msra.mxu0 0.0
    %286 = vmatprep.subr.mxu0 0.0
    %287 = vmatpush2.msra.mxu0 0.0
    %288 = vmatprep.subr.mxu0 0.0
    %289 = vmatpush2.msra.mxu0 0.0
    %290 = vmatprep.subr.mxu0 0.0
    %291 = vmatpush2.msra.mxu0 0.0
    %292 = vmatprep.subr.mxu0 0.0
    %293 = vmatpush2.msra.mxu0 0.0
    %294 = vmatprep.mubr.f32.mxu0 0.0
    %295 = vmatmul.mubr.f32.gmra.mxu0 %v209
    %v296 = vpop.f32.mrf.mxu0
    %v297 = vadd.f32 %v229, %v296
    %v298 = vpop.f32.mrf.mxu0
    %299 = vdwg.mxu0
    %v300 = vmax.f32 %v297, 0.0
    %v301 = vld [vmem:[#allocation2 + $0x180] sm:$0xff]
    %v302 = vld [vmem:[#allocation2 + $0x188] sm:$0xff]
    %v303 = vld [vmem:[#allocation2 + $0x190] sm:$0xff]
    %v304 = vld [vmem:[#allocation2 + $0x198] sm:$0xff]
    %v305 = vld [vmem:[#allocation2 + $0x1a0] sm:$0xff]
    %v306 = vld [vmem:[#allocation2 + $0x1a8] sm:$0xff]
    %v307 = vld [vmem:[#allocation2 + $0x1b0] sm:$0xff]
    %v308 = vld [vmem:[#allocation2 + $0x1b8] sm:$0xff]
    %v309 = vld [vmem:[#allocation2 + $0x1c0] sm:$0xff]
    %v310 = vld [vmem:[#allocation2 + $0x1c8] sm:$0xff]
    %v311 = vld [vmem:[#allocation2 + $0x1d0] sm:$0xff]
    %v312 = vld [vmem:[#allocation2 + $0x1d8] sm:$0xff]
    %v313 = vld [vmem:[#allocation2 + $0x1e0] sm:$0xff]
    %v314 = vld [vmem:[#allocation2 + $0x1e8] sm:$0xff]
    %v315 = vld [vmem:[#allocation2 + $0x1f0] sm:$0xff]
    %v316 = vld [vmem:[#allocation2 + $0x1f8] sm:$0xff]
    %v317 = vlaneseq
    %v318 = vshrl.u32 %v317, 7
    %v319 = vsub.s32 3, %v318
    %v320 = vrot.slane %v26, %v319
    %321 = vmatprep.subr.mxu0 0.0
    %322 = vmatpush1.msra.mxu0 %v316
    %323 = vmatprep.subr.mxu0 0.0
    %324 = vmatpush1.msra.mxu0 %v315
    %325 = vmatprep.subr.mxu0 0.0
    %326 = vmatpush1.msra.mxu0 %v314
    %327 = vmatprep.subr.mxu0 0.0
    %328 = vmatpush1.msra.mxu0 %v313
    %329 = vmatprep.subr.mxu0 0.0
    %330 = vmatpush1.msra.mxu0 %v312
    %331 = vmatprep.subr.mxu0 0.0
    %332 = vmatpush1.msra.mxu0 %v311
    %333 = vmatprep.subr.mxu0 0.0
    %334 = vmatpush1.msra.mxu0 %v310
    %335 = vmatprep.subr.mxu0 0.0
    %336 = vmatpush1.msra.mxu0 %v309
    %337 = vmatprep.subr.mxu0 0.0
    %338 = vmatpush1.msra.mxu0 %v308
    %339 = vmatprep.subr.mxu0 0.0
    %340 = vmatpush1.msra.mxu0 %v307
    %341 = vmatprep.subr.mxu0 0.0
    %342 = vmatpush1.msra.mxu0 %v306
    %343 = vmatprep.subr.mxu0 0.0
    %344 = vmatpush1.msra.mxu0 %v305
    %345 = vmatprep.subr.mxu0 0.0
    %346 = vmatpush1.msra.mxu0 %v304
    %347 = vmatprep.subr.mxu0 0.0
    %348 = vmatpush1.msra.mxu0 %v303
    %349 = vmatprep.subr.mxu0 0.0
    %350 = vmatpush1.msra.mxu0 %v302
    %351 = vmatprep.subr.mxu0 0.0
    %352 = vmatpush1.msra.mxu0 %v301
    %353 = vmatprep.subr.mxu0 0.0
    %354 = vmatpush2.msra.mxu0 0.0
    %355 = vmatprep.subr.mxu0 0.0
    %356 = vmatpush2.msra.mxu0 0.0
    %357 = vmatprep.subr.mxu0 0.0
    %358 = vmatpush2.msra.mxu0 0.0
    %359 = vmatprep.subr.mxu0 0.0
    %360 = vmatpush2.msra.mxu0 0.0
    %361 = vmatprep.subr.mxu0 0.0
    %362 = vmatpush2.msra.mxu0 0.0
    %363 = vmatprep.subr.mxu0 0.0
    %364 = vmatpush2.msra.mxu0 0.0
    %365 = vmatprep.subr.mxu0 0.0
    %366 = vmatpush2.msra.mxu0 0.0
    %367 = vmatprep.subr.mxu0 0.0
    %368 = vmatpush2.msra.mxu0 0.0
    %369 = vmatprep.subr.mxu0 0.0
    %370 = vmatpush2.msra.mxu0 0.0
    %371 = vmatprep.subr.mxu0 0.0
    %372 = vmatpush2.msra.mxu0 0.0
    %373 = vmatprep.subr.mxu0 0.0
    %374 = vmatpush2.msra.mxu0 0.0
    %375 = vmatprep.subr.mxu0 0.0
    %376 = vmatpush2.msra.mxu0 0.0
    %377 = vmatprep.subr.mxu0 0.0
    %378 = vmatpush2.msra.mxu0 0.0
    %379 = vmatprep.subr.mxu0 0.0
    %380 = vmatpush2.msra.mxu0 0.0
    %381 = vmatprep.subr.mxu0 0.0
    %382 = vmatpush2.msra.mxu0 0.0
    %383 = vmatprep.subr.mxu0 0.0
    %384 = vmatpush2.msra.mxu0 0.0
    %385 = vmatprep.mubr.f32.mxu0 0.0
    %386 = vmatmul.mubr.f32.gmra.mxu0 %v300
    %v387 = vpop.f32.mrf.mxu0
    %v388 = vadd.f32 %v320, %v387
    %v389 = vpop.f32.mrf.mxu0
    %390 = vdwg.mxu0
    %v391 = vmax.f32 %v388, 0.0
    %v392 = vld [vmem:[#allocation2 + $0x200] sm:$0xff]
    %v393 = vld [vmem:[#allocation2 + $0x208] sm:$0xff]
    %v394 = vld [vmem:[#allocation2 + $0x210] sm:$0xff]
    %v395 = vld [vmem:[#allocation2 + $0x218] sm:$0xff]
    %v396 = vld [vmem:[#allocation2 + $0x220] sm:$0xff]
    %v397 = vld [vmem:[#allocation2 + $0x228] sm:$0xff]
    %v398 = vld [vmem:[#allocation2 + $0x230] sm:$0xff]
    %v399 = vld [vmem:[#allocation2 + $0x238] sm:$0xff]
    %v400 = vld [vmem:[#allocation2 + $0x240] sm:$0xff]
    %v401 = vld [vmem:[#allocation2 + $0x248] sm:$0xff]
    %v402 = vld [vmem:[#allocation2 + $0x250] sm:$0xff]
    %v403 = vld [vmem:[#allocation2 + $0x258] sm:$0xff]
    %v404 = vld [vmem:[#allocation2 + $0x260] sm:$0xff]
    %v405 = vld [vmem:[#allocation2 + $0x268] sm:$0xff]
    %v406 = vld [vmem:[#allocation2 + $0x270] sm:$0xff]
    %v407 = vld [vmem:[#allocation2 + $0x278] sm:$0xff]
    %v408 = vlaneseq
    %v409 = vshrl.u32 %v408, 7
    %v410 = vsub.s32 4, %v409
    %v411 = vrot.slane %v26, %v410
    %412 = vmatprep.subr.mxu0 0.0
    %413 = vmatpush1.msra.mxu0 %v407
    %414 = vmatprep.subr.mxu0 0.0
    %415 = vmatpush1.msra.mxu0 %v406
    %416 = vmatprep.subr.mxu0 0.0
    %417 = vmatpush1.msra.mxu0 %v405
    %418 = vmatprep.subr.mxu0 0.0
    %419 = vmatpush1.msra.mxu0 %v404
    %420 = vmatprep.subr.mxu0 0.0
    %421 = vmatpush1.msra.mxu0 %v403
    %422 = vmatprep.subr.mxu0 0.0
    %423 = vmatpush1.msra.mxu0 %v402
    %424 = vmatprep.subr.mxu0 0.0
    %425 = vmatpush1.msra.mxu0 %v401
    %426 = vmatprep.subr.mxu0 0.0
    %427 = vmatpush1.msra.mxu0 %v400
    %428 = vmatprep.subr.mxu0 0.0
    %429 = vmatpush1.msra.mxu0 %v399
    %430 = vmatprep.subr.mxu0 0.0
    %431 = vmatpush1.msra.mxu0 %v398
    %432 = vmatprep.subr.mxu0 0.0
    %433 = vmatpush1.msra.mxu0 %v397
    %434 = vmatprep.subr.mxu0 0.0
    %435 = vmatpush1.msra.mxu0 %v396
    %436 = vmatprep.subr.mxu0 0.0
    %437 = vmatpush1.msra.mxu0 %v395
    %438 = vmatprep.subr.mxu0 0.0
    %439 = vmatpush1.msra.mxu0 %v394
    %440 = vmatprep.subr.mxu0 0.0
    %441 = vmatpush1.msra.mxu0 %v393
    %442 = vmatprep.subr.mxu0 0.0
    %443 = vmatpush1.msra.mxu0 %v392
    %444 = vmatprep.subr.mxu0 0.0
    %445 = vmatpush2.msra.mxu0 0.0
    %446 = vmatprep.subr.mxu0 0.0
    %447 = vmatpush2.msra.mxu0 0.0
    %448 = vmatprep.subr.mxu0 0.0
    %449 = vmatpush2.msra.mxu0 0.0
    %450 = vmatprep.subr.mxu0 0.0
    %451 = vmatpush2.msra.mxu0 0.0
    %452 = vmatprep.subr.mxu0 0.0
    %453 = vmatpush2.msra.mxu0 0.0
    %454 = vmatprep.subr.mxu0 0.0
    %455 = vmatpush2.msra.mxu0 0.0
    %456 = vmatprep.subr.mxu0 0.0
    %457 = vmatpush2.msra.mxu0 0.0
    %458 = vmatprep.subr.mxu0 0.0
    %459 = vmatpush2.msra.mxu0 0.0
    %460 = vmatprep.subr.mxu0 0.0
    %461 = vmatpush2.msra.mxu0 0.0
    %462 = vmatprep.subr.mxu0 0.0
    %463 = vmatpush2.msra.mxu0 0.0
    %464 = vmatprep.subr.mxu0 0.0
    %465 = vmatpush2.msra.mxu0 0.0
    %466 = vmatprep.subr.mxu0 0.0
    %467 = vmatpush2.msra.mxu0 0.0
    %468 = vmatprep.subr.mxu0 0.0
    %469 = vmatpush2.msra.mxu0 0.0
    %470 = vmatprep.subr.mxu0 0.0
    %471 = vmatpush2.msra.mxu0 0.0
    %472 = vmatprep.subr.mxu0 0.0
    %473 = vmatpush2.msra.mxu0 0.0
    %474 = vmatprep.subr.mxu0 0.0
    %475 = vmatpush2.msra.mxu0 0.0
    %476 = vmatprep.mubr.f32.mxu0 0.0
    %477 = vmatmul.mubr.f32.gmra.mxu0 %v391
    %v478 = vpop.f32.mrf.mxu0
    %v479 = vadd.f32 %v411, %v478
    %v480 = vpop.f32.mrf.mxu0
    %481 = vdwg.mxu0
    %482 = vst [vmem:[#allocation5] sm:$0xff] %v479
    // Predicated region
    $region14: #{cnn_forward.1} parent=1 // pred_check
      _
    $region15: #{cnn_forward.1} parent=1 // pred_check_branch
      %484 = sbr.rel (0) target = $region17
    $region16: #{cnn_forward.1} parent=1 // pred_region
      %s486 = ssub.s32 128, 128
      %487 = vsyncadd [#allocation4], %s486
      %s489 = sshll.u32 [#allocation5], 4
      %s490 = int_to_ptr.vmem [resolvable:$true] %s489
      %492 = dma.vmem_to_hbm [thread:$0]  %s490, 128, %s2, [#allocation4]
    $region17: #{cnn_forward.1} parent=1 // pred_fallthru
      _
    // Predicated region
    $region18: #{cnn_forward.1} parent=1 // pred_check
      _
    $region19: #{cnn_forward.1} parent=1 // pred_check_branch
      %494 = sbr.rel (0) target = $region21
    $region20: #{cnn_forward.1} parent=1 // pred_region
      %495 = dma.done [#allocation4], 128
    $region21: #{cnn_forward.1} parent=1 // pred_fallthru
      _
    %496 = vsyncpa [#allocation3], 1
    %497 = vsyncpa [#allocation4], 1

</llo_original>
